<compile_context>
chip_gen: v6e
topology: v6e:2x2x1
jax: 0.10.0
libtpu: 0.0.40
codegen_flags: <defaults>
</compile_context>

<pallas_src>
import functools

import jax
import jax.numpy as jnp
from jax.experimental import pallas as pl
from jax.experimental.pallas import tpu as pltpu


def _round_up(n, m):
    return ((n + m - 1) // m) * m


def _last_token_linear_kernel(x_ref, w_ref, b_ref, o_ref, acc_ref):
    """One (TM, TN) output tile; k (reduction) is the innermost grid axis.

    x_ref: [TM, TK]   last-token activations
    w_ref: [TK, TN]   weight tile
    b_ref: [1, TN]    bias with "+2" folded in (k-invariant, stays resident)
    o_ref: [TM, TN]   output tile (written only on the last k step)
    acc_ref: [TM, TN] f32 scratch accumulator
    """
    k = pl.program_id(2)

    @pl.when(k == 0)
    def _init():
        acc_ref[...] = jnp.zeros_like(acc_ref)

    acc_ref[...] += jnp.dot(x_ref[...], w_ref[...],
                            preferred_element_type=jnp.float32)

    @pl.when(k == pl.num_programs(2) - 1)
    def _finalize():
        o_ref[...] = (acc_ref[...] + b_ref[...]).astype(o_ref.dtype)


@functools.partial(jax.jit,
                   static_argnames=("tm", "tn", "tk", "compute_dtype"))
def my_compound_forward(x, w, b, *, tm=256, tn=256, tk=512,
                        compute_dtype=jnp.float32):
    """forward(x) = Linear(x)[:, -1, :] + 2.

    x: [batch, seq, d_in], w: [d_in, d_out], b: [d_out] -> [batch, d_out] f32.
    """
    batch, seq, d_in = x.shape
    assert w.shape[0] == d_in
    d_out = w.shape[1]

    # Fold the "+2" into the bias once (removes a VPU add per output tile).
    bias = (b.astype(jnp.float32) + 2.0).reshape(1, d_out)

    # MXU / lane-friendly tile sizes, clamped to the (padded) problem size.
    TM = min(tm, _round_up(batch, 8))
    TN = min(tn, _round_up(d_out, 128))
    TK = min(tk, _round_up(d_in, 128))

    Bp = _round_up(batch, TM)
    Np = _round_up(d_out, TN)
    Kp = _round_up(d_in, TK)

    # x: fuse the last-token slice into the BlockSpec when no padding/casting
    # is needed (zero-copy, slice becomes a free DMA offset).  Otherwise slice
    # first and pad/cast only the small [batch, d_in] matrix.
    if Bp == batch and Kp == d_in and x.dtype == compute_dtype:
        x_in = x
        x_spec = pl.BlockSpec((TM, pl.Squeezed(), TK),
                              lambda i, j, k: (i, seq - 1, k))
    else:
        x_last = x[:, -1, :].astype(compute_dtype)
        x_in = jnp.pad(x_last, ((0, Bp - batch), (0, Kp - d_in)))
        x_spec = pl.BlockSpec((TM, TK), lambda i, j, k: (i, k))

    # Weights / bias: zero-pad to tile multiples (exact result, sliced off below).
    w_in = w.astype(compute_dtype)
    if (Kp, Np) != (d_in, d_out):
        w_in = jnp.pad(w_in, ((0, Kp - d_in), (0, Np - d_out)))
    b_in = bias if Np == d_out else jnp.pad(bias, ((0, 0), (0, Np - d_out)))

    grid = (Bp // TM, Np // TN, Kp // TK)

    out = pl.pallas_call(
        _last_token_linear_kernel,
        out_shape=jax.ShapeDtypeStruct((Bp, Np), jnp.float32),
        grid=grid,
        in_specs=[
            x_spec,
            pl.BlockSpec((TK, TN), lambda i, j, k: (k, j)),
            pl.BlockSpec((1, TN), lambda i, j, k: (0, j)),
        ],
        out_specs=pl.BlockSpec((TM, TN), lambda i, j, k: (i, j)),
        scratch_shapes=[pltpu.VMEM((TM, TN), jnp.float32)],
        compiler_params=pltpu.CompilerParams(
            dimension_semantics=("parallel", "parallel", "arbitrary"),
            vmem_limit_bytes=32 * 1024 * 1024,
        ),
    )(x_in, w_in, b_in)

    return out[:batch, :d_out]


if __name__ == "__main__":
    # --- 1) Demo shapes implied by forward(): [batch, seq, hidden] ----------
    batch, seq, d_in, d_out = 2, 8, 32, 32
    kx, kw, kb = jax.random.split(jax.random.PRNGKey(0), 3)
    x = jax.random.normal(kx, (batch, seq, d_in), dtype=jnp.float32)
    w = jax.random.normal(kw, (d_in, d_out), dtype=jnp.float32) * 0.05
    b = jax.random.normal(kb, (d_out,), dtype=jnp.float32) * 0.05

    out = jax.block_until_ready(my_compound_forward(x, w, b))
    ref = x[:, -1, :] @ w + b + 2.0
    assert out.shape == (batch, d_out)
    assert jnp.allclose(out, ref, atol=1e-3, rtol=1e-3)

    # --- 2) Tile-aligned shapes: exercises the fused last-token BlockSpec and
    #        the multi-tile (N, K) pipeline with the f32 accumulator ---------
    batch2, seq2, d_in2, d_out2 = 16, 8, 1024, 384
    kx2, kw2, kb2 = jax.random.split(jax.random.PRNGKey(1), 3)
    x2 = jax.random.normal(kx2, (batch2, seq2, d_in2), dtype=jnp.float32)
    w2 = jax.random.normal(kw2, (d_in2, d_out2), dtype=jnp.float32) * 0.05
    b2 = jax.random.normal(kb2, (d_out2,), dtype=jnp.float32) * 0.05

    out2 = jax.block_until_ready(my_compound_forward(x2, w2, b2))
    ref2 = x2[:, -1, :] @ w2 + b2 + 2.0
    assert out2.shape == (batch2, d_out2)
    assert jnp.allclose(out2, ref2, atol=1e-1, rtol=1e-2)

    # --- 3) bf16 streaming path (halves HBM weight traffic on v6e/v7x) ------
    out3 = jax.block_until_ready(
        my_compound_forward(x2, w2, b2, compute_dtype=jnp.bfloat16))
    assert jnp.allclose(out3, ref2, atol=1e-1, rtol=5e-2)

    print("KERNEL_OK")
</pallas_src>

<mosaic_0001>
module attributes {stable_mosaic.version = 11 : i64} {
  func.func @_last_token_linear_kernel(%arg0: i32, %arg1: i32, %arg2: i32, %arg3: memref<8x128xf32, #tpu.memory_space<vmem>>, %arg4: memref<128x128xf32, #tpu.memory_space<vmem>>, %arg5: memref<1x128xf32, #tpu.memory_space<vmem>>, %arg6: memref<8x128xf32, #tpu.memory_space<vmem>>, %arg7: memref<8x128xf32, #tpu.memory_space<vmem>>) attributes {dimension_semantics = [#tpu.dimension_semantics<parallel>, #tpu.dimension_semantics<parallel>, #tpu.dimension_semantics<arbitrary>], iteration_bounds = array<i64: 1, 1, 1>, scalar_prefetch = 0 : i64, scratch_operands = 1 : i64, tpu.core_type = #tpu.core_type<tc>, window_params = [{transform_indices = @transform_0, window_bounds = array<i64: 8, 128>}, {transform_indices = @transform_1, window_bounds = array<i64: 128, 128>}, {transform_indices = @transform_2, window_bounds = array<i64: 1, 128>}, {transform_indices = @transform_3, window_bounds = array<i64: 8, 128>}]} {
    %c0_i32 = arith.constant 0 : i32
    %0 = arith.cmpi eq, %arg2, %c0_i32 : i32
    %1 = arith.extui %0 : i1 to i32
    %c0_i32_0 = arith.constant 0 : i32
    %2 = arith.cmpi ne, %1, %c0_i32_0 : i32
    scf.if %2 {
      %cst_10 = arith.constant 0.000000e+00 : f32
      %12 = vector.broadcast %cst_10 : f32 to vector<8x128xf32>
      %c0_11 = arith.constant 0 : index
      %c0_12 = arith.constant 0 : index
      %13 = vector.load %arg7[%c0_11, %c0_12] : memref<8x128xf32, #tpu.memory_space<vmem>>, vector<8x128xf32>
      tpu.vector_store %arg7[%c0_11, %c0_12], %12 {strides = array<i32>} : memref<8x128xf32, #tpu.memory_space<vmem>>, vector<8x128xf32>,
    } else {
    }
    %c0 = arith.constant 0 : index
    %c0_1 = arith.constant 0 : index
    %3 = vector.load %arg7[%c0, %c0_1] : memref<8x128xf32, #tpu.memory_space<vmem>>, vector<8x128xf32>
    %c0_2 = arith.constant 0 : index
    %c0_3 = arith.constant 0 : index
    %4 = vector.load %arg3[%c0_2, %c0_3] : memref<8x128xf32, #tpu.memory_space<vmem>>, vector<8x128xf32>
    %c0_4 = arith.constant 0 : index
    %c0_5 = arith.constant 0 : index
    %5 = vector.load %arg4[%c0_4, %c0_5] : memref<128x128xf32, #tpu.memory_space<vmem>>, vector<128x128xf32>
    %cst = arith.constant dense<0.000000e+00> : vector<8x128xf32>
    %6 = tpu.matmul %4, %5, %cst {dimension_numbers = #tpu.dot_dimension_numbers<[1], [0], [0], [1], [0, 0, 1, 1], [], []>} : vector<8x128xf32>, vector<128x128xf32>, vector<8x128xf32> -> vector<8x128xf32>
    %7 = arith.addf %3, %6 : vector<8x128xf32>
    %c0_6 = arith.constant 0 : index
    %c0_7 = arith.constant 0 : index
    %8 = vector.load %arg7[%c0_6, %c0_7] : memref<8x128xf32, #tpu.memory_space<vmem>>, vector<8x128xf32>
    tpu.vector_store %arg7[%c0_6, %c0_7], %7 {strides = array<i32>} : memref<8x128xf32, #tpu.memory_space<vmem>>, vector<8x128xf32>,
    %c0_i32_8 = arith.constant 0 : i32
    %9 = arith.cmpi eq, %arg2, %c0_i32_8 : i32
    %10 = arith.extui %9 : i1 to i32
    %c0_i32_9 = arith.constant 0 : i32
    %11 = arith.cmpi ne, %10, %c0_i32_9 : i32
    scf.if %11 {
      %c0_10 = arith.constant 0 : index
      %c0_11 = arith.constant 0 : index
      %12 = vector.load %arg7[%c0_10, %c0_11] : memref<8x128xf32, #tpu.memory_space<vmem>>, vector<8x128xf32>
      %c0_12 = arith.constant 0 : index
      %c0_13 = arith.constant 0 : index
      %13 = vector.load %arg5[%c0_12, %c0_13] : memref<1x128xf32, #tpu.memory_space<vmem>>, vector<1x128xf32>
      %14 = vector.broadcast %13 : vector<1x128xf32> to vector<8x128xf32>
      %15 = arith.addf %12, %14 : vector<8x128xf32>
      %c0_14 = arith.constant 0 : index
      %c0_15 = arith.constant 0 : index
      %16 = vector.load %arg6[%c0_14, %c0_15] : memref<8x128xf32, #tpu.memory_space<vmem>>, vector<8x128xf32>
      tpu.vector_store %arg6[%c0_14, %c0_15], %15 {strides = array<i32>} : memref<8x128xf32, #tpu.memory_space<vmem>>, vector<8x128xf32>,
    } else {
    }
    return
  }
  func.func @transform_0(%arg0: i32, %arg1: i32, %arg2: i32) -> (i32, i32) {
    %c0_i32 = arith.constant 0 : i32
    return %arg0, %arg2 : i32, i32
  }
  func.func @transform_1(%arg0: i32, %arg1: i32, %arg2: i32) -> (i32, i32) {
    %c0_i32 = arith.constant 0 : i32
    return %arg2, %arg1 : i32, i32
  }
  func.func @transform_2(%arg0: i32, %arg1: i32, %arg2: i32) -> (i32, i32) {
    %c0_i32 = arith.constant 0 : i32
    %c0_i32_0 = arith.constant 0 : i32
    return %c0_i32, %arg1 : i32, i32
  }
  func.func @transform_3(%arg0: i32, %arg1: i32, %arg2: i32) -> (i32, i32) {
    %c0_i32 = arith.constant 0 : i32
    return %arg0, %arg1 : i32, i32
  }
}

</mosaic_0001>

<llo_original>
// kernel: my_compound_forward.1
$region0: #{my_compound_forward.1}
  #allocation0 [shape = 'u32[]', space=smem, size = 0x4, offset = 0x4, fixed_abs, tag = 'smem constant byte address 0x4 - core index']
  #allocation1 [shape = 'u32[144,128]{1,0:T(1,128)}', space=vmem, size = 0x12000, scoped, tag = 'internal scratch']
  #allocation2 [shape = 'f32[8,128]{1,0:T(8,128)}', space=vmem, size = 0x1000, scoped, tag = 'scratch operand']
  %s0 = inlined_call_operand.vmem [shape: f32[8,128], index: 0, kind: input, shape index: {}]
  %s1 = inlined_call_operand.vmem [shape: f32[128,128], index: 1, kind: input, shape index: {}]
  %s2 = inlined_call_operand.vmem [shape: f32[1,128], index: 2, kind: input, shape index: {}]
  %s3 = inlined_call_operand.vmem [shape: f32[8,128], index: 3, kind: output, shape index: {}]
  %s4 = sld [smem:[#allocation0]]
  $region30: #{my_compound_forward.1} parent=0
    _
  %s6 = ssub.s32 1, %s4
  %s7 = scalar_select 0, %s6, %s4
  // Predicated region
  $region2: #{my_compound_forward.1} parent=0 // pred_check
    _
  $region3: #{my_compound_forward.1} parent=0 // pred_check_branch
    %9 = sbr.rel (0) target = $region5
  $region4: #{my_compound_forward.1} parent=0 // pred_region
    _
  $region5: #{my_compound_forward.1} parent=0 // pred_fallthru
    _
  // Predicated region
  $region6: #{my_compound_forward.1} parent=0 // pred_check
    _
  $region7: #{my_compound_forward.1} parent=0 // pred_check_branch
    %11 = sbr.rel (0) target = $region9
  $region8: #{my_compound_forward.1} parent=0 // pred_region
    _
  $region9: #{my_compound_forward.1} parent=0 // pred_fallthru
    _
  // Predicated region
  $region10: #{my_compound_forward.1} parent=0 // pred_check
    _
  $region11: #{my_compound_forward.1} parent=0 // pred_check_branch
    %13 = sbr.rel (0) target = $region13
  $region12: #{my_compound_forward.1} parent=0 // pred_region
    _
  $region13: #{my_compound_forward.1} parent=0 // pred_fallthru
    _
  %p14 = scmp.eq.s32.totalorder 0, 0
  // Predicated region
  $region14: #{my_compound_forward.1} parent=0 // pred_check
    %p15 = pneg %p14
  $region15: #{my_compound_forward.1} parent=0 // pred_check_branch
    %17 = sbr.rel (%p15) target = $region17
  $region16: #{my_compound_forward.1} parent=0 // pred_region
    %18 = vst [vmem:[#allocation2] sm:$0xff] 0.0
  $region17: #{my_compound_forward.1} parent=0 // pred_fallthru
    _
  %v19 = vld [vmem:[#allocation2] sm:$0xff]
  %v20 = vld [vmem:[%s0] sm:$0xff]
  %v21 = vld [vmem:[%s1] sm:$0xff]
  %v22 = vld [vmem:[%s1 + $0x8] sm:$0xff]
  %v23 = vld [vmem:[%s1 + $0x10] sm:$0xff]
  %v24 = vld [vmem:[%s1 + $0x18] sm:$0xff]
  %v25 = vld [vmem:[%s1 + $0x20] sm:$0xff]
  %v26 = vld [vmem:[%s1 + $0x28] sm:$0xff]
  %v27 = vld [vmem:[%s1 + $0x30] sm:$0xff]
  %v28 = vld [vmem:[%s1 + $0x38] sm:$0xff]
  %v29 = vld [vmem:[%s1 + $0x40] sm:$0xff]
  %v30 = vld [vmem:[%s1 + $0x48] sm:$0xff]
  %v31 = vld [vmem:[%s1 + $0x50] sm:$0xff]
  %v32 = vld [vmem:[%s1 + $0x58] sm:$0xff]
  %v33 = vld [vmem:[%s1 + $0x60] sm:$0xff]
  %v34 = vld [vmem:[%s1 + $0x68] sm:$0xff]
  %v35 = vld [vmem:[%s1 + $0x70] sm:$0xff]
  %v36 = vld [vmem:[%s1 + $0x78] sm:$0xff]
  %37 = vmatprep.subr.mxu0 0.0
  %38 = vmatpush1.msra.mxu0 %v36
  %39 = vmatprep.subr.mxu0 0.0
  %40 = vmatpush1.msra.mxu0 %v35
  %41 = vmatprep.subr.mxu0 0.0
  %42 = vmatpush1.msra.mxu0 %v34
  %43 = vmatprep.subr.mxu0 0.0
  %44 = vmatpush1.msra.mxu0 %v33
  %45 = vmatprep.subr.mxu0 0.0
  %46 = vmatpush1.msra.mxu0 %v32
  %47 = vmatprep.subr.mxu0 0.0
  %48 = vmatpush1.msra.mxu0 %v31
  %49 = vmatprep.subr.mxu0 0.0
  %50 = vmatpush1.msra.mxu0 %v30
  %51 = vmatprep.subr.mxu0 0.0
  %52 = vmatpush1.msra.mxu0 %v29
  %53 = vmatprep.subr.mxu0 0.0
  %54 = vmatpush1.msra.mxu0 %v28
  %55 = vmatprep.subr.mxu0 0.0
  %56 = vmatpush1.msra.mxu0 %v27
  %57 = vmatprep.subr.mxu0 0.0
  %58 = vmatpush1.msra.mxu0 %v26
  %59 = vmatprep.subr.mxu0 0.0
  %60 = vmatpush1.msra.mxu0 %v25
  %61 = vmatprep.subr.mxu0 0.0
  %62 = vmatpush1.msra.mxu0 %v24
  %63 = vmatprep.subr.mxu0 0.0
  %64 = vmatpush1.msra.mxu0 %v23
  %65 = vmatprep.subr.mxu0 0.0
  %66 = vmatpush1.msra.mxu0 %v22
  %67 = vmatprep.subr.mxu0 0.0
  %68 = vmatpush1.msra.mxu0 %v21
  %69 = vmatprep.subr.mxu0 0.0
  %70 = vmatpush2.msra.mxu0 0.0
  %71 = vmatprep.subr.mxu0 0.0
  %72 = vmatpush2.msra.mxu0 0.0
  %73 = vmatprep.subr.mxu0 0.0
  %74 = vmatpush2.msra.mxu0 0.0
  %75 = vmatprep.subr.mxu0 0.0
  %76 = vmatpush2.msra.mxu0 0.0
  %77 = vmatprep.subr.mxu0 0.0
  %78 = vmatpush2.msra.mxu0 0.0
  %79 = vmatprep.subr.mxu0 0.0
  %80 = vmatpush2.msra.mxu0 0.0
  %81 = vmatprep.subr.mxu0 0.0
  %82 = vmatpush2.msra.mxu0 0.0
  %83 = vmatprep.subr.mxu0 0.0
  %84 = vmatpush2.msra.mxu0 0.0
  %85 = vmatprep.subr.mxu0 0.0
  %86 = vmatpush2.msra.mxu0 0.0
  %87 = vmatprep.subr.mxu0 0.0
  %88 = vmatpush2.msra.mxu0 0.0
  %89 = vmatprep.subr.mxu0 0.0
  %90 = vmatpush2.msra.mxu0 0.0
  %91 = vmatprep.subr.mxu0 0.0
  %92 = vmatpush2.msra.mxu0 0.0
  %93 = vmatprep.subr.mxu0 0.0
  %94 = vmatpush2.msra.mxu0 0.0
  %95 = vmatprep.subr.mxu0 0.0
  %96 = vmatpush2.msra.mxu0 0.0
  %97 = vmatprep.subr.mxu0 0.0
  %98 = vmatpush2.msra.mxu0 0.0
  %99 = vmatprep.subr.mxu0 0.0
  %100 = vmatpush2.msra.mxu0 0.0
  %101 = vmatprep.mubr.f32.mxu0 0.0
  %102 = vmatmul.mubr.f32.gmra.mxu0 %v20
  %v103 = vpop.f32.mrf.mxu0
  %v104 = vadd.f32 0.0, %v103
  %v105 = vpop.f32.mrf.mxu0
  %106 = vdwg.mxu0
  %v107 = vadd.f32 %v19, %v104
  %108 = vst [vmem:[#allocation2] sm:$0xff] %v107
  // Predicated region
  $region18: #{my_compound_forward.1} parent=0 // pred_check
    %p109 = pneg %p14
  $region19: #{my_compound_forward.1} parent=0 // pred_check_branch
    %111 = sbr.rel (%p109) target = $region21
  $region20: #{my_compound_forward.1} parent=0 // pred_region
    %v112 = vld [vmem:[#allocation2] sm:$0xff]
    %v113 = vld [vmem:[%s2] sm:$0x1]
    %v115 = vlaneseq
    %v116 = vshrl.u32 %v115, 7
    %v117 = vsub.s32 0, %v116
    %v118 = vrot.slane %v113, %v117
    %v120 = vadd.f32 %v112, %v118
    %121 = vst [vmem:[%s3] sm:$0xff] %v120
  $region21: #{my_compound_forward.1} parent=0 // pred_fallthru
    _
  // Predicated region
  $region22: #{my_compound_forward.1} parent=0 // pred_check
    _
  $region23: #{my_compound_forward.1} parent=0 // pred_check_branch
    %123 = sbr.rel (0) target = $region25
  $region24: #{my_compound_forward.1} parent=0 // pred_region
    _
  $region25: #{my_compound_forward.1} parent=0 // pred_fallthru
    _
  // Predicated region
  $region26: #{my_compound_forward.1} parent=0 // pred_check
    _
  $region27: #{my_compound_forward.1} parent=0 // pred_check_branch
    %125 = sbr.rel (0) target = $region29
  $region28: #{my_compound_forward.1} parent=0 // pred_region
    _
  $region29: #{my_compound_forward.1} parent=0 // pred_fallthru
    _

</llo_original>
